<compile_context>
chip_gen: v5e
topology: v5e:2x2
jax: 0.10.0
libtpu: 0.0.40
codegen_flags: <defaults>
</compile_context>

<pallas_src>
import jax
import jax.numpy as jnp
from jax.experimental import pallas as pl
from jax.experimental.pallas import tpu as pltpu


def _mlp_kernel(x_ref, w1_ref, b1_ref, w2_ref, b2_ref, o_ref):
    # x: (TB, D) f32 | w1: (D, H) bf16 | b1: (1, H) f32 | w2: (1, H) f32
    # b2: (1,) f32 in SMEM | o: (TB, 1) f32
    x = x_ref[...].astype(w1_ref.dtype)       # in-kernel cast (VPU, hidden under DMA slack)
    h = jnp.dot(x, w1_ref[...], preferred_element_type=jnp.float32)
    h = jnp.maximum(h + b1_ref[...], 0.0)
    # Second layer (H -> 1): broadcast-multiply + reduce on VPU/XLU (no MXU weight load).
    hw = h * w2_ref[...]
    width = hw.shape[-1]
    # Fold lanes down to 128 with cheap, tile-aligned VPU adds before the XLU reduce.
    while width > 128 and width % 256 == 0:
        half = width // 2
        hw = hw[:, :half] + hw[:, half:]
        width = half
    logits = jnp.sum(hw, axis=-1, keepdims=True) + b2_ref[0]
    o_ref[...] = logits.astype(o_ref.dtype)


def _round_up(n, m):
    return (n + m - 1) // m * m


def paraphrase_classifier_forward(x, w1, b1, w2, b2, *, block_b=1024,
                                  compute_dtype=jnp.bfloat16):
    """Forward pass of ParaphraseClassifier.

    x : (B, D) float32
    w1: (D, H)   -- transpose of PyTorch fc[0].weight (any float dtype; pre-cast to
                    bf16 outside this call to skip the per-call weight cast pass)
    b1: (1, H) or (H,)
    w2: (H, 1) or (1, H)  -- fc[2].weight (either layout)
    b2: (1, 1), (1,), or scalar
    Returns (B, 1) float32 logits.
    """
    B, D = x.shape
    H = w1.shape[1]

    # Normalize tiny parameter layouts.
    b1 = jnp.asarray(b1, jnp.float32).reshape(1, H)
    w2t = jnp.asarray(w2, jnp.float32).reshape(1, H)   # lane-dense row vector
    b2s = jnp.asarray(b2, jnp.float32).reshape(1)      # scalar via SMEM

    # Weight: cast only if not already in the compute dtype (pre-cast & cache upstream
    # for latency-sensitive small-batch inference).
    w1c = w1 if w1.dtype == compute_dtype else w1.astype(compute_dtype)

    # Activations stay f32 end-to-end in HBM; no wrapper-side cast / pad passes.
    x = jnp.asarray(x, jnp.float32)

    # Batch tile: multiple of 8 sublanes, capped at 2048 (v7x VMEM budget). Ragged B is
    # handled by the masked partial last block, not by padding x.
    tb = min(_round_up(max(block_b, 8), 8), 2048, _round_up(B, 8))
    nb = pl.cdiv(B, tb)

    wbytes = jnp.dtype(compute_dtype).itemsize
    cost = pl.CostEstimate(
        flops=2 * B * D * H + 4 * B * H,
        transcendentals=0,
        bytes_accessed=(B * D * 4            # x stream (f32)
                        + D * H * wbytes     # w1 (loaded once, resident)
                        + (2 * H + 1) * 4    # b1, w2, b2
                        + B * 4),            # logits out
    )

    # VMEM working set: double-buffered f32 x tile + single resident w1/b1/w2 + margin.
    vmem_bytes = (2 * tb * D * 4 + 2 * tb * 4 + D * H * wbytes + 4 * H * 4 + (4 << 20))
    vmem_limit = int(min(max(vmem_bytes, 32 << 20), 64 << 20))

    out = pl.pallas_call(
        _mlp_kernel,
        out_shape=jax.ShapeDtypeStruct((B, 1), jnp.float32),
        grid=(nb,),
        in_specs=[
            pl.BlockSpec((tb, D), lambda i: (i, 0)),                 # x: streamed per tile
            pl.BlockSpec((D, H), lambda i: (0, 0),
                         pipeline_mode=pl.Buffered(1)),              # w1: weight-stationary
            pl.BlockSpec((1, H), lambda i: (0, 0),
                         pipeline_mode=pl.Buffered(1)),              # b1: resident
            pl.BlockSpec((1, H), lambda i: (0, 0),
                         pipeline_mode=pl.Buffered(1)),              # w2 (transposed): resident
            pl.BlockSpec(memory_space=pltpu.MemorySpace.SMEM),       # b2 scalar
        ],
        out_specs=pl.BlockSpec((tb, 1), lambda i: (i, 0)),
        compiler_params=pltpu.CompilerParams(
            dimension_semantics=("parallel",),     # v7x: shard batch over TensorCores
            vmem_limit_bytes=vmem_limit,
        ),
        cost_estimate=cost,
    )(x, w1c, b1, w2t, b2s)

    return out


def init_params(key, input_dim=1536, hidden=256):
    """Deterministic init mimicking PyTorch Linear default U(-1/sqrt(fan_in), +)."""
    k1, k2, k3, k4 = jax.random.split(key, 4)
    bound1 = 1.0 / jnp.sqrt(jnp.float32(input_dim))
    bound2 = 1.0 / jnp.sqrt(jnp.float32(hidden))
    w1 = jax.random.uniform(k1, (input_dim, hidden), jnp.float32, -bound1, bound1)
    b1 = jax.random.uniform(k2, (1, hidden), jnp.float32, -bound1, bound1)
    w2 = jax.random.uniform(k3, (hidden, 1), jnp.float32, -bound2, bound2)
    b2 = jax.random.uniform(k4, (1, 1), jnp.float32, -bound2, bound2)
    return w1, b1, w2, b2


def _reference(x, w1, b1, w2, b2):
    # Mirrors the kernel's numerics: bf16-rounded x/w1, f32 accumulation.
    xb = x.astype(jnp.bfloat16).astype(jnp.float32)
    w1b = jnp.asarray(w1, jnp.float32).astype(jnp.bfloat16).astype(jnp.float32)
    return jnp.maximum(xb @ w1b + b1, 0.0) @ w2 + b2


if __name__ == "__main__":
    key = jax.random.PRNGKey(0)
    kx, kp, kx2, kx3 = jax.random.split(key, 4)

    D, H = 1536, 256
    w1, b1, w2, b2 = init_params(kp, input_dim=D, hidden=H)
    w1_bf16 = w1.astype(jnp.bfloat16)   # pre-cast once, reuse across calls

    # Small exact-tile batch.
    B = 8
    x = jax.random.normal(kx, (B, D), jnp.float32)
    out = jax.block_until_ready(paraphrase_classifier_forward(x, w1_bf16, b1, w2, b2))
    assert out.shape == (B, 1)
    ref = _reference(x, w1, b1, w2, b2)
    assert jnp.allclose(out, ref, atol=2e-3, rtol=2e-3)

    # Ragged multi-tile batch: grid of 2, masked partial last block, no jnp.pad.
    B2 = 200
    x2 = jax.random.normal(kx2, (B2, D), jnp.float32)
    out2 = jax.block_until_ready(
        paraphrase_classifier_forward(x2, w1_bf16, b1, w2, b2, block_b=128))
    assert out2.shape == (B2, 1)
    ref2 = _reference(x2, w1, b1, w2, b2)
    assert jnp.allclose(out2, ref2, atol=2e-3, rtol=2e-3)

    # Batch smaller than (and not a multiple of) the tile: single partial block.
    B3 = 12
    x3 = jax.random.normal(kx3, (B3, D), jnp.float32)
    out3 = jax.block_until_ready(paraphrase_classifier_forward(x3, w1_bf16, b1, w2, b2))
    assert out3.shape == (B3, 1)
    ref3 = _reference(x3, w1, b1, w2, b2)
    assert jnp.allclose(out3, ref3, atol=2e-3, rtol=2e-3)

    print("KERNEL_OK")
</pallas_src>

<mosaic_0001>
module attributes {stable_mosaic.version = 11 : i64} {
  func.func @_mlp_kernel(%arg0: i32, %arg1: memref<8x1536xf32, #tpu.memory_space<vmem>>, %arg2: memref<1536x256xbf16, #tpu.memory_space<vmem>>, %arg3: memref<1x256xf32, #tpu.memory_space<vmem>>, %arg4: memref<1x256xf32, #tpu.memory_space<vmem>>, %arg5: memref<1xf32, #tpu.memory_space<smem>>, %arg6: memref<8x1xf32, #tpu.memory_space<vmem>>) attributes {dimension_semantics = [#tpu.dimension_semantics<parallel>], iteration_bounds = array<i64: 1>, scalar_prefetch = 0 : i64, scratch_operands = 0 : i64, tpu.core_type = #tpu.core_type<tc>, window_params = [{transform_indices = @transform_0, window_bounds = array<i64: 8, 1536>}, {pipeline_mode = #tpu.pipeline_mode<synchronous>, transform_indices = @transform_1, window_bounds = array<i64: 1536, 256>}, {pipeline_mode = #tpu.pipeline_mode<synchronous>, transform_indices = @transform_2, window_bounds = array<i64: 1, 256>}, {pipeline_mode = #tpu.pipeline_mode<synchronous>, transform_indices = @transform_3, window_bounds = array<i64: 1, 256>}, {transform_indices = @transform_4, window_bounds = array<i64: 1>}, {transform_indices = @transform_5, window_bounds = array<i64: 8, 1>}]} {
    %c0 = arith.constant 0 : index
    %c0_0 = arith.constant 0 : index
    %0 = vector.load %arg1[%c0, %c0_0] : memref<8x1536xf32, #tpu.memory_space<vmem>>, vector<8x1536xf32>
    %1 = arith.truncf %0 : vector<8x1536xf32> to vector<8x1536xbf16>
    %c0_1 = arith.constant 0 : index
    %c0_2 = arith.constant 0 : index
    %2 = vector.load %arg2[%c0_1, %c0_2] : memref<1536x256xbf16, #tpu.memory_space<vmem>>, vector<1536x256xbf16>
    %cst = arith.constant dense<0.000000e+00> : vector<8x256xf32>
    %3 = tpu.matmul %1, %2, %cst {dimension_numbers = #tpu.dot_dimension_numbers<[1], [0], [0], [1], [0, 0, 1, 1], [], []>} : vector<8x1536xbf16>, vector<1536x256xbf16>, vector<8x256xf32> -> vector<8x256xf32>
    %c0_3 = arith.constant 0 : index
    %c0_4 = arith.constant 0 : index
    %4 = vector.load %arg3[%c0_3, %c0_4] : memref<1x256xf32, #tpu.memory_space<vmem>>, vector<1x256xf32>
    %5 = vector.broadcast %4 : vector<1x256xf32> to vector<8x256xf32>
    %6 = arith.addf %3, %5 : vector<8x256xf32>
    %cst_5 = arith.constant 0.000000e+00 : f32
    %7 = vector.broadcast %cst_5 : f32 to vector<8x256xf32>
    %8 = arith.maximumf %6, %7 : vector<8x256xf32>
    %c0_6 = arith.constant 0 : index
    %c0_7 = arith.constant 0 : index
    %9 = vector.load %arg4[%c0_6, %c0_7] : memref<1x256xf32, #tpu.memory_space<vmem>>, vector<1x256xf32>
    %10 = vector.broadcast %9 : vector<1x256xf32> to vector<8x256xf32>
    %11 = arith.mulf %8, %10 : vector<8x256xf32>
    %12 = vector.extract_strided_slice %11 {offsets = [0, 0], sizes = [8, 128], strides = [1, 1]} : vector<8x256xf32> to vector<8x128xf32>
    %13 = vector.extract_strided_slice %11 {offsets = [0, 128], sizes = [8, 128], strides = [1, 1]} : vector<8x256xf32> to vector<8x128xf32>
    %14 = arith.addf %12, %13 : vector<8x128xf32>
    %cst_8 = arith.constant dense<0.000000e+00> : vector<8xf32>
    %15 = vector.multi_reduction <add>, %14, %cst_8 [1] : vector<8x128xf32> to vector<8xf32>
    %16 = vector.shape_cast %15 : vector<8xf32> to vector<8x1xf32>
    %c0_9 = arith.constant 0 : index
    %17 = memref.load %arg5[%c0_9] : memref<1xf32, #tpu.memory_space<smem>>
    %18 = vector.broadcast %17 : f32 to vector<8x1xf32>
    %19 = arith.addf %16, %18 : vector<8x1xf32>
    %c0_10 = arith.constant 0 : index
    %c0_11 = arith.constant 0 : index
    %20 = vector.load %arg6[%c0_10, %c0_11] : memref<8x1xf32, #tpu.memory_space<vmem>>, vector<8x1xf32>
    tpu.vector_store %arg6[%c0_10, %c0_11], %19 {strides = array<i32>} : memref<8x1xf32, #tpu.memory_space<vmem>>, vector<8x1xf32>,
    return
  }
  func.func @transform_0(%arg0: i32) -> (i32, i32) {
    %c0_i32 = arith.constant 0 : i32
    %c0_i32_0 = arith.constant 0 : i32
    return %arg0, %c0_i32 : i32, i32
  }
  func.func @transform_1(%arg0: i32) -> (i32, i32) {
    %c0_i32 = arith.constant 0 : i32
    %c0_i32_0 = arith.constant 0 : i32
    %c0_i32_1 = arith.constant 0 : i32
    return %c0_i32, %c0_i32_0 : i32, i32
  }
  func.func @transform_2(%arg0: i32) -> (i32, i32) {
    %c0_i32 = arith.constant 0 : i32
    %c0_i32_0 = arith.constant 0 : i32
    %c0_i32_1 = arith.constant 0 : i32
    return %c0_i32, %c0_i32_0 : i32, i32
  }
  func.func @transform_3(%arg0: i32) -> (i32, i32) {
    %c0_i32 = arith.constant 0 : i32
    %c0_i32_0 = arith.constant 0 : i32
    %c0_i32_1 = arith.constant 0 : i32
    return %c0_i32, %c0_i32_0 : i32, i32
  }
  func.func @transform_4(%arg0: i32) -> i32 {
    %c0_i32 = arith.constant 0 : i32
    %c0_i32_0 = arith.constant 0 : i32
    return %c0_i32 : i32
  }
  func.func @transform_5(%arg0: i32) -> (i32, i32) {
    %c0_i32 = arith.constant 0 : i32
    %c0_i32_0 = arith.constant 0 : i32
    return %arg0, %c0_i32 : i32, i32
  }
}

</mosaic_0001>

<llo_original>
// kernel: tpu_custom_call.1
$region0: #{tpu_custom_call.1}
  #allocation0 [shape = 'u32[]', space=smem, size = 0x4, offset = 0x4, fixed_abs, tag = 'smem constant byte address 0x4 - core index']
  #allocation1 [shape = 'u32[72,128]{1,0:T(1,128)}', space=vmem, size = 0x9000, scoped, tag = 'internal scratch']
  #allocation2 [shape = 'f32[1]{0:T(128)S(6)}', space=smem, size = 0x200, scoped, tag = 'scoped memory for tpu_custom_call.1']
  %s0 = inlined_call_operand.hbm [shape: f32[8,1536], index: 0, kind: input, shape index: {}]
  %s1 = inlined_call_operand.hbm [shape: bf16[1536,256], index: 1, kind: input, shape index: {}]
  %s2 = inlined_call_operand.vmem [shape: f32[1,256], index: 2, kind: input, shape index: {}]
  %s3 = inlined_call_operand.vmem [shape: f32[1,256], index: 3, kind: input, shape index: {}]
  %s4 = inlined_call_operand.<no memory space> [shape: f32[1], index: 4, kind: input, shape index: {}]
  %s5 = inlined_call_operand.vmem [shape: f32[8,1], index: 5, kind: output, shape index: {}]
  %s6 = sld [smem:[#allocation0]]
  $region38: #{tpu_custom_call.1} parent=0
    _
  %s8 = ssub.s32 1, %s6
  %s9 = scalar_select 0, %s8, %s6
  %10 = sst [smem:[#allocation2]] %s4
  $region1: #{tpu_custom_call.1} parent=0
    #allocation3 [shape = 'u8[49152]{0}', space=vmem, size = 0xc000, scoped, tag = 'input window, operand 0, single buffered']
    #allocation4 [shape = 's32[1]{0}', space=sflag, size = 0x4, scoped, tag = 'scoped memory for tpu_custom_call.1']
    #allocation5 [shape = 'u8[786432]{0}', space=vmem, size = 0xc0000, scoped, tag = 'input window, operand 1, single buffered']
    #allocation6 [shape = 's32[1]{0}', space=sflag, size = 0x4, scoped, tag = 'scoped memory for tpu_custom_call.1']
    %11 = vsyncpa [#allocation4], 0
    %12 = vsyncpa [#allocation6], 0
    // Predicated region
    $region2: #{tpu_custom_call.1} parent=1 // pred_check
      _
    $region3: #{tpu_custom_call.1} parent=1 // pred_check_branch
      %14 = sbr.rel (0) target = $region5
    $region4: #{tpu_custom_call.1} parent=1 // pred_region
      %16 = vsyncadd [#allocation4], 0
      %s18 = sshll.u32 %s0, 4
      %s19 = int_to_ptr.hbm [resolvable:$true] %s18
      %s20 = sshll.u32 [#allocation3], 4
      %s21 = int_to_ptr.vmem [resolvable:$true] %s20
      %23 = dma.hbm_to_vmem [thread:$0]  %s19, 1536, %s21, [#allocation4]
    $region5: #{tpu_custom_call.1} parent=1 // pred_fallthru
      _
    // Predicated region
    $region6: #{tpu_custom_call.1} parent=1 // pred_check
      _
    $region7: #{tpu_custom_call.1} parent=1 // pred_check_branch
      %25 = sbr.rel (0) target = $region9
    $region8: #{tpu_custom_call.1} parent=1 // pred_region
      %27 = vsyncadd [#allocation6], 0
      %s28 = sshll.u32 %s1, 4
      %s29 = int_to_ptr.hbm [resolvable:$true] %s28
      %s30 = sshll.u32 [#allocation5], 4
      %s31 = int_to_ptr.vmem [resolvable:$true] %s30
      %36 = dma.hbm_to_vmem [thread:$0]  %s29, 24576, %s31, [#allocation6], 128, 128, 8
    $region9: #{tpu_custom_call.1} parent=1 // pred_fallthru
      _
    // Predicated region
    $region10: #{tpu_custom_call.1} parent=1 // pred_check
      _
    $region11: #{tpu_custom_call.1} parent=1 // pred_check_branch
      %38 = sbr.rel (0) target = $region13
    $region12: #{tpu_custom_call.1} parent=1 // pred_region
      _
    $region13: #{tpu_custom_call.1} parent=1 // pred_fallthru
      _
    // Predicated region
    $region14: #{tpu_custom_call.1} parent=1 // pred_check
      _
    $region15: #{tpu_custom_call.1} parent=1 // pred_check_branch
      %40 = sbr.rel (0) target = $region17
    $region16: #{tpu_custom_call.1} parent=1 // pred_region
      _
    $region17: #{tpu_custom_call.1} parent=1 // pred_fallthru
      _
    // Predicated region
    $region18: #{tpu_custom_call.1} parent=1 // pred_check
      _
    $region19: #{tpu_custom_call.1} parent=1 // pred_check_branch
      %42 = sbr.rel (0) target = $region21
    $region20: #{tpu_custom_call.1} parent=1 // pred_region
      _
    $region21: #{tpu_custom_call.1} parent=1 // pred_fallthru
      _
    // Predicated region
    $region22: #{tpu_custom_call.1} parent=1 // pred_check
      _
    $region23: #{tpu_custom_call.1} parent=1 // pred_check_branch
      %44 = sbr.rel (0) target = $region25
    $region24: #{tpu_custom_call.1} parent=1 // pred_region
      %46 = dma.done [#allocation4], 1536
    $region25: #{tpu_custom_call.1} parent=1 // pred_fallthru
      _
    // Predicated region
    $region26: #{tpu_custom_call.1} parent=1 // pred_check
      _
    $region27: #{tpu_custom_call.1} parent=1 // pred_check_branch
      %48 = sbr.rel (0) target = $region29
    $region28: #{tpu_custom_call.1} parent=1 // pred_region
      %50 = dma.done [#allocation6], 24576
    $region29: #{tpu_custom_call.1} parent=1 // pred_fallthru
      _
    %v51 = vld [vmem:[#allocation3] sm:$0xff]
    %v52 = vld [vmem:[#allocation3 + $0x8] sm:$0xff]
    %v53 = vld [vmem:[#allocation3 + $0x10] sm:$0xff]
    %v54 = vld [vmem:[#allocation3 + $0x18] sm:$0xff]
    %v55 = vld [vmem:[#allocation3 + $0x20] sm:$0xff]
    %v56 = vld [vmem:[#allocation3 + $0x28] sm:$0xff]
    %v57 = vld [vmem:[#allocation3 + $0x30] sm:$0xff]
    %v58 = vld [vmem:[#allocation3 + $0x38] sm:$0xff]
    %v59 = vld [vmem:[#allocation3 + $0x40] sm:$0xff]
    %v60 = vld [vmem:[#allocation3 + $0x48] sm:$0xff]
    %v61 = vld [vmem:[#allocation3 + $0x50] sm:$0xff]
    %v62 = vld [vmem:[#allocation3 + $0x58] sm:$0xff]
    %v63 = vpack.c.bf16 %v51, %v51
    %v64 = vpack.c.bf16 %v52, %v52
    %v65 = vpack.c.bf16 %v53, %v53
    %v66 = vpack.c.bf16 %v54, %v54
    %v67 = vpack.c.bf16 %v55, %v55
    %v68 = vpack.c.bf16 %v56, %v56
    %v69 = vpack.c.bf16 %v57, %v57
    %v70 = vpack.c.bf16 %v58, %v58
    %v71 = vpack.c.bf16 %v59, %v59
    %v72 = vpack.c.bf16 %v60, %v60
    %v73 = vpack.c.bf16 %v61, %v61
    %v74 = vpack.c.bf16 %v62, %v62
    %v75 = vld [vmem:[#allocation5] sm:$0xff]
    %v76 = vld [vmem:[#allocation5 + $0x8] sm:$0xff]
    %v77 = vld [vmem:[#allocation5 + $0x10] sm:$0xff]
    %v78 = vld [vmem:[#allocation5 + $0x18] sm:$0xff]
    %v79 = vld [vmem:[#allocation5 + $0x20] sm:$0xff]
    %v80 = vld [vmem:[#allocation5 + $0x28] sm:$0xff]
    %v81 = vld [vmem:[#allocation5 + $0x30] sm:$0xff]
    %v82 = vld [vmem:[#allocation5 + $0x38] sm:$0xff]
    %v83 = vld [vmem:[#allocation5 + $0x40] sm:$0xff]
    %v84 = vld [vmem:[#allocation5 + $0x48] sm:$0xff]
    %v85 = vld [vmem:[#allocation5 + $0x50] sm:$0xff]
    %v86 = vld [vmem:[#allocation5 + $0x58] sm:$0xff]
    %v87 = vld [vmem:[#allocation5 + $0x60] sm:$0xff]
    %v88 = vld [vmem:[#allocation5 + $0x68] sm:$0xff]
    %v89 = vld [vmem:[#allocation5 + $0x70] sm:$0xff]
    %v90 = vld [vmem:[#allocation5 + $0x78] sm:$0xff]
    %v91 = vld [vmem:[#allocation5 + $0x80] sm:$0xff]
    %v92 = vld [vmem:[#allocation5 + $0x88] sm:$0xff]
    %v93 = vld [vmem:[#allocation5 + $0x90] sm:$0xff]
    %v94 = vld [vmem:[#allocation5 + $0x98] sm:$0xff]
    %v95 = vld [vmem:[#allocation5 + $0xa0] sm:$0xff]
    %v96 = vld [vmem:[#allocation5 + $0xa8] sm:$0xff]
    %v97 = vld [vmem:[#allocation5 + $0xb0] sm:$0xff]
    %v98 = vld [vmem:[#allocation5 + $0xb8] sm:$0xff]
    %v99 = vld [vmem:[#allocation5 + $0xc0] sm:$0xff]
    %v100 = vld [vmem:[#allocation5 + $0xc8] sm:$0xff]
    %v101 = vld [vmem:[#allocation5 + $0xd0] sm:$0xff]
    %v102 = vld [vmem:[#allocation5 + $0xd8] sm:$0xff]
    %v103 = vld [vmem:[#allocation5 + $0xe0] sm:$0xff]
    %v104 = vld [vmem:[#allocation5 + $0xe8] sm:$0xff]
    %v105 = vld [vmem:[#allocation5 + $0xf0] sm:$0xff]
    %v106 = vld [vmem:[#allocation5 + $0xf8] sm:$0xff]
    %v107 = vld [vmem:[#allocation5 + $0x100] sm:$0xff]
    %v108 = vld [vmem:[#allocation5 + $0x108] sm:$0xff]
    %v109 = vld [vmem:[#allocation5 + $0x110] sm:$0xff]
    %v110 = vld [vmem:[#allocation5 + $0x118] sm:$0xff]
    %v111 = vld [vmem:[#allocation5 + $0x120] sm:$0xff]
    %v112 = vld [vmem:[#allocation5 + $0x128] sm:$0xff]
    %v113 = vld [vmem:[#allocation5 + $0x130] sm:$0xff]
    %v114 = vld [vmem:[#allocation5 + $0x138] sm:$0xff]
    %v115 = vld [vmem:[#allocation5 + $0x140] sm:$0xff]
    %v116 = vld [vmem:[#allocation5 + $0x148] sm:$0xff]
    %v117 = vld [vmem:[#allocation5 + $0x150] sm:$0xff]
    %v118 = vld [vmem:[#allocation5 + $0x158] sm:$0xff]
    %v119 = vld [vmem:[#allocation5 + $0x160] sm:$0xff]
    %v120 = vld [vmem:[#allocation5 + $0x168] sm:$0xff]
    %v121 = vld [vmem:[#allocation5 + $0x170] sm:$0xff]
    %v122 = vld [vmem:[#allocation5 + $0x178] sm:$0xff]
    %v123 = vld [vmem:[#allocation5 + $0x180] sm:$0xff]
    %v124 = vld [vmem:[#allocation5 + $0x188] sm:$0xff]
    %v125 = vld [vmem:[#allocation5 + $0x190] sm:$0xff]
    %v126 = vld [vmem:[#allocation5 + $0x198] sm:$0xff]
    %v127 = vld [vmem:[#allocation5 + $0x1a0] sm:$0xff]
    %v128 = vld [vmem:[#allocation5 + $0x1a8] sm:$0xff]
    %v129 = vld [vmem:[#allocation5 + $0x1b0] sm:$0xff]
    %v130 = vld [vmem:[#allocation5 + $0x1b8] sm:$0xff]
    %v131 = vld [vmem:[#allocation5 + $0x1c0] sm:$0xff]
    %v132 = vld [vmem:[#allocation5 + $0x1c8] sm:$0xff]
    %v133 = vld [vmem:[#allocation5 + $0x1d0] sm:$0xff]
    %v134 = vld [vmem:[#allocation5 + $0x1d8] sm:$0xff]
    %v135 = vld [vmem:[#allocation5 + $0x1e0] sm:$0xff]
    %v136 = vld [vmem:[#allocation5 + $0x1e8] sm:$0xff]
    %v137 = vld [vmem:[#allocation5 + $0x1f0] sm:$0xff]
    %v138 = vld [vmem:[#allocation5 + $0x1f8] sm:$0xff]
    %v139 = vld [vmem:[#allocation5 + $0x200] sm:$0xff]
    %v140 = vld [vmem:[#allocation5 + $0x208] sm:$0xff]
    %v141 = vld [vmem:[#allocation5 + $0x210] sm:$0xff]
    %v142 = vld [vmem:[#allocation5 + $0x218] sm:$0xff]
    %v143 = vld [vmem:[#allocation5 + $0x220] sm:$0xff]
    %v144 = vld [vmem:[#allocation5 + $0x228] sm:$0xff]
    %v145 = vld [vmem:[#allocation5 + $0x230] sm:$0xff]
    %v146 = vld [vmem:[#allocation5 + $0x238] sm:$0xff]
    %v147 = vld [vmem:[#allocation5 + $0x240] sm:$0xff]
    %v148 = vld [vmem:[#allocation5 + $0x248] sm:$0xff]
    %v149 = vld [vmem:[#allocation5 + $0x250] sm:$0xff]
    %v150 = vld [vmem:[#allocation5 + $0x258] sm:$0xff]
    %v151 = vld [vmem:[#allocation5 + $0x260] sm:$0xff]
    %v152 = vld [vmem:[#allocation5 + $0x268] sm:$0xff]
    %v153 = vld [vmem:[#allocation5 + $0x270] sm:$0xff]
    %v154 = vld [vmem:[#allocation5 + $0x278] sm:$0xff]
    %v155 = vld [vmem:[#allocation5 + $0x280] sm:$0xff]
    %v156 = vld [vmem:[#allocation5 + $0x288] sm:$0xff]
    %v157 = vld [vmem:[#allocation5 + $0x290] sm:$0xff]
    %v158 = vld [vmem:[#allocation5 + $0x298] sm:$0xff]
    %v159 = vld [vmem:[#allocation5 + $0x2a0] sm:$0xff]
    %v160 = vld [vmem:[#allocation5 + $0x2a8] sm:$0xff]
    %v161 = vld [vmem:[#allocation5 + $0x2b0] sm:$0xff]
    %v162 = vld [vmem:[#allocation5 + $0x2b8] sm:$0xff]
    %v163 = vld [vmem:[#allocation5 + $0x2c0] sm:$0xff]
    %v164 = vld [vmem:[#allocation5 + $0x2c8] sm:$0xff]
    %v165 = vld [vmem:[#allocation5 + $0x2d0] sm:$0xff]
    %v166 = vld [vmem:[#allocation5 + $0x2d8] sm:$0xff]
    %v167 = vld [vmem:[#allocation5 + $0x2e0] sm:$0xff]
    %v168 = vld [vmem:[#allocation5 + $0x2e8] sm:$0xff]
    %v169 = vld [vmem:[#allocation5 + $0x2f0] sm:$0xff]
    %v170 = vld [vmem:[#allocation5 + $0x2f8] sm:$0xff]
    %v171 = vld [vmem:[#allocation5 + $0x300] sm:$0xff]
    %v172 = vld [vmem:[#allocation5 + $0x308] sm:$0xff]
    %v173 = vld [vmem:[#allocation5 + $0x310] sm:$0xff]
    %v174 = vld [vmem:[#allocation5 + $0x318] sm:$0xff]
    %v175 = vld [vmem:[#allocation5 + $0x320] sm:$0xff]
    %v176 = vld [vmem:[#allocation5 + $0x328] sm:$0xff]
    %v177 = vld [vmem:[#allocation5 + $0x330] sm:$0xff]
    %v178 = vld [vmem:[#allocation5 + $0x338] sm:$0xff]
    %v179 = vld [vmem:[#allocation5 + $0x340] sm:$0xff]
    %v180 = vld [vmem:[#allocation5 + $0x348] sm:$0xff]
    %v181 = vld [vmem:[#allocation5 + $0x350] sm:$0xff]
    %v182 = vld [vmem:[#allocation5 + $0x358] sm:$0xff]
    %v183 = vld [vmem:[#allocation5 + $0x360] sm:$0xff]
    %v184 = vld [vmem:[#allocation5 + $0x368] sm:$0xff]
    %v185 = vld [vmem:[#allocation5 + $0x370] sm:$0xff]
    %v186 = vld [vmem:[#allocation5 + $0x378] sm:$0xff]
    %v187 = vld [vmem:[#allocation5 + $0x380] sm:$0xff]
    %v188 = vld [vmem:[#allocation5 + $0x388] sm:$0xff]
    %v189 = vld [vmem:[#allocation5 + $0x390] sm:$0xff]
    %v190 = vld [vmem:[#allocation5 + $0x398] sm:$0xff]
    %v191 = vld [vmem:[#allocation5 + $0x3a0] sm:$0xff]
    %v192 = vld [vmem:[#allocation5 + $0x3a8] sm:$0xff]
    %v193 = vld [vmem:[#allocation5 + $0x3b0] sm:$0xff]
    %v194 = vld [vmem:[#allocation5 + $0x3b8] sm:$0xff]
    %v195 = vld [vmem:[#allocation5 + $0x3c0] sm:$0xff]
    %v196 = vld [vmem:[#allocation5 + $0x3c8] sm:$0xff]
    %v197 = vld [vmem:[#allocation5 + $0x3d0] sm:$0xff]
    %v198 = vld [vmem:[#allocation5 + $0x3d8] sm:$0xff]
    %v199 = vld [vmem:[#allocation5 + $0x3e0] sm:$0xff]
    %v200 = vld [vmem:[#allocation5 + $0x3e8] sm:$0xff]
    %v201 = vld [vmem:[#allocation5 + $0x3f0] sm:$0xff]
    %v202 = vld [vmem:[#allocation5 + $0x3f8] sm:$0xff]
    %v203 = vld [vmem:[#allocation5 + $0x400] sm:$0xff]
    %v204 = vld [vmem:[#allocation5 + $0x408] sm:$0xff]
    %v205 = vld [vmem:[#allocation5 + $0x410] sm:$0xff]
    %v206 = vld [vmem:[#allocation5 + $0x418] sm:$0xff]
    %v207 = vld [vmem:[#allocation5 + $0x420] sm:$0xff]
    %v208 = vld [vmem:[#allocation5 + $0x428] sm:$0xff]
    %v209 = vld [vmem:[#allocation5 + $0x430] sm:$0xff]
    %v210 = vld [vmem:[#allocation5 + $0x438] sm:$0xff]
    %v211 = vld [vmem:[#allocation5 + $0x440] sm:$0xff]
    %v212 = vld [vmem:[#allocation5 + $0x448] sm:$0xff]
    %v213 = vld [vmem:[#allocation5 + $0x450] sm:$0xff]
    %v214 = vld [vmem:[#allocation5 + $0x458] sm:$0xff]
    %v215 = vld [vmem:[#allocation5 + $0x460] sm:$0xff]
    %v216 = vld [vmem:[#allocation5 + $0x468] sm:$0xff]
    %v217 = vld [vmem:[#allocation5 + $0x470] sm:$0xff]
    %v218 = vld [vmem:[#allocation5 + $0x478] sm:$0xff]
    %v219 = vld [vmem:[#allocation5 + $0x480] sm:$0xff]
    %v220 = vld [vmem:[#allocation5 + $0x488] sm:$0xff]
    %v221 = vld [vmem:[#allocation5 + $0x490] sm:$0xff]
    %v222 = vld [vmem:[#allocation5 + $0x498] sm:$0xff]
    %v223 = vld [vmem:[#allocation5 + $0x4a0] sm:$0xff]
    %v224 = vld [vmem:[#allocation5 + $0x4a8] sm:$0xff]
    %v225 = vld [vmem:[#allocation5 + $0x4b0] sm:$0xff]
    %v226 = vld [vmem:[#allocation5 + $0x4b8] sm:$0xff]
    %v227 = vld [vmem:[#allocation5 + $0x4c0] sm:$0xff]
    %v228 = vld [vmem:[#allocation5 + $0x4c8] sm:$0xff]
    %v229 = vld [vmem:[#allocation5 + $0x4d0] sm:$0xff]
    %v230 = vld [vmem:[#allocation5 + $0x4d8] sm:$0xff]
    %v231 = vld [vmem:[#allocation5 + $0x4e0] sm:$0xff]
    %v232 = vld [vmem:[#allocation5 + $0x4e8] sm:$0xff]
    %v233 = vld [vmem:[#allocation5 + $0x4f0] sm:$0xff]
    %v234 = vld [vmem:[#allocation5 + $0x4f8] sm:$0xff]
    %v235 = vld [vmem:[#allocation5 + $0x500] sm:$0xff]
    %v236 = vld [vmem:[#allocation5 + $0x508] sm:$0xff]
    %v237 = vld [vmem:[#allocation5 + $0x510] sm:$0xff]
    %v238 = vld [vmem:[#allocation5 + $0x518] sm:$0xff]
    %v239 = vld [vmem:[#allocation5 + $0x520] sm:$0xff]
    %v240 = vld [vmem:[#allocation5 + $0x528] sm:$0xff]
    %v241 = vld [vmem:[#allocation5 + $0x530] sm:$0xff]
    %v242 = vld [vmem:[#allocation5 + $0x538] sm:$0xff]
    %v243 = vld [vmem:[#allocation5 + $0x540] sm:$0xff]
    %v244 = vld [vmem:[#allocation5 + $0x548] sm:$0xff]
    %v245 = vld [vmem:[#allocation5 + $0x550] sm:$0xff]
    %v246 = vld [vmem:[#allocation5 + $0x558] sm:$0xff]
    %v247 = vld [vmem:[#allocation5 + $0x560] sm:$0xff]
    %v248 = vld [vmem:[#allocation5 + $0x568] sm:$0xff]
    %v249 = vld [vmem:[#allocation5 + $0x570] sm:$0xff]
    %v250 = vld [vmem:[#allocation5 + $0x578] sm:$0xff]
    %v251 = vld [vmem:[#allocation5 + $0x580] sm:$0xff]
    %v252 = vld [vmem:[#allocation5 + $0x588] sm:$0xff]
    %v253 = vld [vmem:[#allocation5 + $0x590] sm:$0xff]
    %v254 = vld [vmem:[#allocation5 + $0x598] sm:$0xff]
    %v255 = vld [vmem:[#allocation5 + $0x5a0] sm:$0xff]
    %v256 = vld [vmem:[#allocation5 + $0x5a8] sm:$0xff]
    %v257 = vld [vmem:[#allocation5 + $0x5b0] sm:$0xff]
    %v258 = vld [vmem:[#allocation5 + $0x5b8] sm:$0xff]
    %v259 = vld [vmem:[#allocation5 + $0x5c0] sm:$0xff]
    %v260 = vld [vmem:[#allocation5 + $0x5c8] sm:$0xff]
    %v261 = vld [vmem:[#allocation5 + $0x5d0] sm:$0xff]
    %v262 = vld [vmem:[#allocation5 + $0x5d8] sm:$0xff]
    %v263 = vld [vmem:[#allocation5 + $0x5e0] sm:$0xff]
    %v264 = vld [vmem:[#allocation5 + $0x5e8] sm:$0xff]
    %v265 = vld [vmem:[#allocation5 + $0x5f0] sm:$0xff]
    %v266 = vld [vmem:[#allocation5 + $0x5f8] sm:$0xff]
    %v267 = vld [vmem:[%s2] sm:$0x3]
    %v269 = vperm.slane %v267, 0
    %v270 = vperm.slane %v267, 1
    %v465 = vunpack.c.l.b16 %v75
    %v466 = vunpack.c.h.b16 %v75
    %v467 = vunpack.c.l.b16 %v76
    %v468 = vunpack.c.h.b16 %v76
    %v469 = vunpack.c.l.b16 %v77
    %v470 = vunpack.c.h.b16 %v77
    %v471 = vunpack.c.l.b16 %v78
    %v472 = vunpack.c.h.b16 %v78
    %v473 = vunpack.c.l.b16 %v79
    %v474 = vunpack.c.h.b16 %v79
    %v475 = vunpack.c.l.b16 %v80
    %v476 = vunpack.c.h.b16 %v80
    %v477 = vunpack.c.l.b16 %v81
    %v478 = vunpack.c.h.b16 %v81
    %v479 = vunpack.c.l.b16 %v82
    %v480 = vunpack.c.h.b16 %v82
    %v481 = vunpack.c.l.b16 %v83
    %v482 = vunpack.c.h.b16 %v83
    %v483 = vunpack.c.l.b16 %v84
    %v484 = vunpack.c.h.b16 %v84
    %v485 = vunpack.c.l.b16 %v85
    %v486 = vunpack.c.h.b16 %v85
    %v487 = vunpack.c.l.b16 %v86
    %v488 = vunpack.c.h.b16 %v86
    %v489 = vunpack.c.l.b16 %v87
    %v490 = vunpack.c.h.b16 %v87
    %v491 = vunpack.c.l.b16 %v88
    %v492 = vunpack.c.h.b16 %v88
    %v493 = vunpack.c.l.b16 %v89
    %v494 = vunpack.c.h.b16 %v89
    %v495 = vunpack.c.l.b16 %v90
    %v496 = vunpack.c.h.b16 %v90
    %v497 = vunpack.c.l.b16 %v91
    %v498 = vunpack.c.h.b16 %v91
    %v499 = vunpack.c.l.b16 %v92
    %v500 = vunpack.c.h.b16 %v92
    %v501 = vunpack.c.l.b16 %v93
    %v502 = vunpack.c.h.b16 %v93
    %v503 = vunpack.c.l.b16 %v94
    %v504 = vunpack.c.h.b16 %v94
    %v505 = vunpack.c.l.b16 %v95
    %v506 = vunpack.c.h.b16 %v95
    %v507 = vunpack.c.l.b16 %v96
    %v508 = vunpack.c.h.b16 %v96
    %v509 = vunpack.c.l.b16 %v97
    %v510 = vunpack.c.h.b16 %v97
    %v511 = vunpack.c.l.b16 %v98
    %v512 = vunpack.c.h.b16 %v98
    %v513 = vunpack.c.l.b16 %v99
    %v514 = vunpack.c.h.b16 %v99
    %v515 = vunpack.c.l.b16 %v100
    %v516 = vunpack.c.h.b16 %v100
    %v517 = vunpack.c.l.b16 %v101
    %v518 = vunpack.c.h.b16 %v101
    %v519 = vunpack.c.l.b16 %v102
    %v520 = vunpack.c.h.b16 %v102
    %v521 = vunpack.c.l.b16 %v103
    %v522 = vunpack.c.h.b16 %v103
    %v523 = vunpack.c.l.b16 %v104
    %v524 = vunpack.c.h.b16 %v104
    %v525 = vunpack.c.l.b16 %v105
    %v526 = vunpack.c.h.b16 %v105
    %v527 = vunpack.c.l.b16 %v106
    %v528 = vunpack.c.h.b16 %v106
    %v529 = vunpack.c.l.b16 %v107
    %v530 = vunpack.c.h.b16 %v107
    %v531 = vunpack.c.l.b16 %v108
    %v532 = vunpack.c.h.b16 %v108
    %v533 = vunpack.c.l.b16 %v109
    %v534 = vunpack.c.h.b16 %v109
    %v535 = vunpack.c.l.b16 %v110
    %v536 = vunpack.c.h.b16 %v110
    %v537 = vunpack.c.l.b16 %v111
    %v538 = vunpack.c.h.b16 %v111
    %v539 = vunpack.c.l.b16 %v112
    %v540 = vunpack.c.h.b16 %v112
    %v541 = vunpack.c.l.b16 %v113
    %v542 = vunpack.c.h.b16 %v113
    %v543 = vunpack.c.l.b16 %v114
    %v544 = vunpack.c.h.b16 %v114
    %v545 = vunpack.c.l.b16 %v115
    %v546 = vunpack.c.h.b16 %v115
    %v547 = vunpack.c.l.b16 %v116
    %v548 = vunpack.c.h.b16 %v116
    %v549 = vunpack.c.l.b16 %v117
    %v550 = vunpack.c.h.b16 %v117
    %v551 = vunpack.c.l.b16 %v118
    %v552 = vunpack.c.h.b16 %v118
    %v553 = vunpack.c.l.b16 %v119
    %v554 = vunpack.c.h.b16 %v119
    %v555 = vunpack.c.l.b16 %v120
    %v556 = vunpack.c.h.b16 %v120
    %v557 = vunpack.c.l.b16 %v121
    %v558 = vunpack.c.h.b16 %v121
    %v559 = vunpack.c.l.b16 %v122
    %v560 = vunpack.c.h.b16 %v122
    %v561 = vunpack.c.l.b16 %v123
    %v562 = vunpack.c.h.b16 %v123
    %v563 = vunpack.c.l.b16 %v124
    %v564 = vunpack.c.h.b16 %v124
    %v565 = vunpack.c.l.b16 %v125
    %v566 = vunpack.c.h.b16 %v125
    %v567 = vunpack.c.l.b16 %v126
    %v568 = vunpack.c.h.b16 %v126
    %v569 = vunpack.c.l.b16 %v127
    %v570 = vunpack.c.h.b16 %v127
    %v571 = vunpack.c.l.b16 %v128
    %v572 = vunpack.c.h.b16 %v128
    %v573 = vunpack.c.l.b16 %v129
    %v574 = vunpack.c.h.b16 %v129
    %v575 = vunpack.c.l.b16 %v130
    %v576 = vunpack.c.h.b16 %v130
    %v577 = vunpack.c.l.b16 %v131
    %v578 = vunpack.c.h.b16 %v131
    %v579 = vunpack.c.l.b16 %v132
    %v580 = vunpack.c.h.b16 %v132
    %v581 = vunpack.c.l.b16 %v133
    %v582 = vunpack.c.h.b16 %v133
    %v583 = vunpack.c.l.b16 %v134
    %v584 = vunpack.c.h.b16 %v134
    %v585 = vunpack.c.l.b16 %v135
    %v586 = vunpack.c.h.b16 %v135
    %v587 = vunpack.c.l.b16 %v136
    %v588 = vunpack.c.h.b16 %v136
    %v589 = vunpack.c.l.b16 %v137
    %v590 = vunpack.c.h.b16 %v137
    %v591 = vunpack.c.l.b16 %v138
    %v592 = vunpack.c.h.b16 %v138
    %v593 = vunpack.c.l.b16 %v139
    %v594 = vunpack.c.h.b16 %v139
    %v595 = vunpack.c.l.b16 %v140
    %v596 = vunpack.c.h.b16 %v140
    %v597 = vunpack.c.l.b16 %v141
    %v598 = vunpack.c.h.b16 %v141
    %v599 = vunpack.c.l.b16 %v142
    %v600 = vunpack.c.h.b16 %v142
    %v601 = vunpack.c.l.b16 %v143
    %v602 = vunpack.c.h.b16 %v143
    %v603 = vunpack.c.l.b16 %v144
    %v604 = vunpack.c.h.b16 %v144
    %v605 = vunpack.c.l.b16 %v145
    %v606 = vunpack.c.h.b16 %v145
    %v607 = vunpack.c.l.b16 %v146
    %v608 = vunpack.c.h.b16 %v146
    %v609 = vunpack.c.l.b16 %v147
    %v610 = vunpack.c.h.b16 %v147
    %v611 = vunpack.c.l.b16 %v148
    %v612 = vunpack.c.h.b16 %v148
    %v613 = vunpack.c.l.b16 %v149
    %v614 = vunpack.c.h.b16 %v149
    %v615 = vunpack.c.l.b16 %v150
    %v616 = vunpack.c.h.b16 %v150
    %v617 = vunpack.c.l.b16 %v151
    %v618 = vunpack.c.h.b16 %v151
    %v619 = vunpack.c.l.b16 %v152
    %v620 = vunpack.c.h.b16 %v152
    %v621 = vunpack.c.l.b16 %v153
    %v622 = vunpack.c.h.b16 %v153
    %v623 = vunpack.c.l.b16 %v154
    %v624 = vunpack.c.h.b16 %v154
    %v625 = vunpack.c.l.b16 %v155
    %v626 = vunpack.c.h.b16 %v155
    %v627 = vunpack.c.l.b16 %v156
    %v628 = vunpack.c.h.b16 %v156
    %v629 = vunpack.c.l.b16 %v157
    %v630 = vunpack.c.h.b16 %v157
    %v631 = vunpack.c.l.b16 %v158
    %v632 = vunpack.c.h.b16 %v158
    %v633 = vunpack.c.l.b16 %v159
    %v634 = vunpack.c.h.b16 %v159
    %v635 = vunpack.c.l.b16 %v160
    %v636 = vunpack.c.h.b16 %v160
    %v637 = vunpack.c.l.b16 %v161
    %v638 = vunpack.c.h.b16 %v161
    %v639 = vunpack.c.l.b16 %v162
    %v640 = vunpack.c.h.b16 %v162
    %v641 = vunpack.c.l.b16 %v163
    %v642 = vunpack.c.h.b16 %v163
    %v643 = vunpack.c.l.b16 %v164
    %v644 = vunpack.c.h.b16 %v164
    %v645 = vunpack.c.l.b16 %v165
    %v646 = vunpack.c.h.b16 %v165
    %v647 = vunpack.c.l.b16 %v166
    %v648 = vunpack.c.h.b16 %v166
    %v649 = vunpack.c.l.b16 %v167
    %v650 = vunpack.c.h.b16 %v167
    %v651 = vunpack.c.l.b16 %v168
    %v652 = vunpack.c.h.b16 %v168
    %v653 = vunpack.c.l.b16 %v169
    %v654 = vunpack.c.h.b16 %v169
    %v655 = vunpack.c.l.b16 %v170
    %v656 = vunpack.c.h.b16 %v170
    %v657 = vunpack.c.l.b16 %v171
    %v658 = vunpack.c.h.b16 %v171
    %v659 = vunpack.c.l.b16 %v172
    %v660 = vunpack.c.h.b16 %v172
    %v661 = vunpack.c.l.b16 %v173
    %v662 = vunpack.c.h.b16 %v173
    %v663 = vunpack.c.l.b16 %v174
    %v664 = vunpack.c.h.b16 %v174
    %v665 = vunpack.c.l.b16 %v175
    %v666 = vunpack.c.h.b16 %v175
    %v667 = vunpack.c.l.b16 %v176
    %v668 = vunpack.c.h.b16 %v176
    %v669 = vunpack.c.l.b16 %v177
    %v670 = vunpack.c.h.b16 %v177
    %v671 = vunpack.c.l.b16 %v178
    %v672 = vunpack.c.h.b16 %v178
    %v673 = vunpack.c.l.b16 %v179
    %v674 = vunpack.c.h.b16 %v179
    %v675 = vunpack.c.l.b16 %v180
    %v676 = vunpack.c.h.b16 %v180
    %v677 = vunpack.c.l.b16 %v181
    %v678 = vunpack.c.h.b16 %v181
    %v679 = vunpack.c.l.b16 %v182
    %v680 = vunpack.c.h.b16 %v182
    %v681 = vunpack.c.l.b16 %v183
    %v682 = vunpack.c.h.b16 %v183
    %v683 = vunpack.c.l.b16 %v184
    %v684 = vunpack.c.h.b16 %v184
    %v685 = vunpack.c.l.b16 %v185
    %v686 = vunpack.c.h.b16 %v185
    %v687 = vunpack.c.l.b16 %v186
    %v688 = vunpack.c.h.b16 %v186
    %v689 = vunpack.c.l.b16 %v187
    %v690 = vunpack.c.h.b16 %v187
    %v691 = vunpack.c.l.b16 %v188
    %v692 = vunpack.c.h.b16 %v188
    %v693 = vunpack.c.l.b16 %v189
    %v694 = vunpack.c.h.b16 %v189
    %v695 = vunpack.c.l.b16 %v190
    %v696 = vunpack.c.h.b16 %v190
    %v697 = vunpack.c.l.b16 %v191
    %v698 = vunpack.c.h.b16 %v191
    %v699 = vunpack.c.l.b16 %v192
    %v700 = vunpack.c.h.b16 %v192
    %v701 = vunpack.c.l.b16 %v193
    %v702 = vunpack.c.h.b16 %v193
    %v703 = vunpack.c.l.b16 %v194
    %v704 = vunpack.c.h.b16 %v194
    %v705 = vunpack.c.l.b16 %v195
    %v706 = vunpack.c.h.b16 %v195
    %v707 = vunpack.c.l.b16 %v196
    %v708 = vunpack.c.h.b16 %v196
    %v709 = vunpack.c.l.b16 %v197
    %v710 = vunpack.c.h.b16 %v197
    %v711 = vunpack.c.l.b16 %v198
    %v712 = vunpack.c.h.b16 %v198
    %v713 = vunpack.c.l.b16 %v199
    %v714 = vunpack.c.h.b16 %v199
    %v715 = vunpack.c.l.b16 %v200
    %v716 = vunpack.c.h.b16 %v200
    %v717 = vunpack.c.l.b16 %v201
    %v718 = vunpack.c.h.b16 %v201
    %v719 = vunpack.c.l.b16 %v202
    %v720 = vunpack.c.h.b16 %v202
    %v721 = vunpack.c.l.b16 %v203
    %v722 = vunpack.c.h.b16 %v203
    %v723 = vunpack.c.l.b16 %v204
    %v724 = vunpack.c.h.b16 %v204
    %v725 = vunpack.c.l.b16 %v205
    %v726 = vunpack.c.h.b16 %v205
    %v727 = vunpack.c.l.b16 %v206
    %v728 = vunpack.c.h.b16 %v206
    %v729 = vunpack.c.l.b16 %v207
    %v730 = vunpack.c.h.b16 %v207
    %v731 = vunpack.c.l.b16 %v208
    %v732 = vunpack.c.h.b16 %v208
    %v733 = vunpack.c.l.b16 %v209
    %v734 = vunpack.c.h.b16 %v209
    %v735 = vunpack.c.l.b16 %v210
    %v736 = vunpack.c.h.b16 %v210
    %v737 = vunpack.c.l.b16 %v211
    %v738 = vunpack.c.h.b16 %v211
    %v739 = vunpack.c.l.b16 %v212
    %v740 = vunpack.c.h.b16 %v212
    %v741 = vunpack.c.l.b16 %v213
    %v742 = vunpack.c.h.b16 %v213
    %v743 = vunpack.c.l.b16 %v214
    %v744 = vunpack.c.h.b16 %v214
    %v745 = vunpack.c.l.b16 %v215
    %v746 = vunpack.c.h.b16 %v215
    %v747 = vunpack.c.l.b16 %v216
    %v748 = vunpack.c.h.b16 %v216
    %v749 = vunpack.c.l.b16 %v217
    %v750 = vunpack.c.h.b16 %v217
    %v751 = vunpack.c.l.b16 %v218
    %v752 = vunpack.c.h.b16 %v218
    %v753 = vunpack.c.l.b16 %v219
    %v754 = vunpack.c.h.b16 %v219
    %v755 = vunpack.c.l.b16 %v220
    %v756 = vunpack.c.h.b16 %v220
    %v757 = vunpack.c.l.b16 %v221
    %v758 = vunpack.c.h.b16 %v221
    %v759 = vunpack.c.l.b16 %v222
    %v760 = vunpack.c.h.b16 %v222
    %v761 = vunpack.c.l.b16 %v223
    %v762 = vunpack.c.h.b16 %v223
    %v763 = vunpack.c.l.b16 %v224
    %v764 = vunpack.c.h.b16 %v224
    %v765 = vunpack.c.l.b16 %v225
    %v766 = vunpack.c.h.b16 %v225
    %v767 = vunpack.c.l.b16 %v226
    %v768 = vunpack.c.h.b16 %v226
    %v769 = vunpack.c.l.b16 %v227
    %v770 = vunpack.c.h.b16 %v227
    %v771 = vunpack.c.l.b16 %v228
    %v772 = vunpack.c.h.b16 %v228
    %v773 = vunpack.c.l.b16 %v229
    %v774 = vunpack.c.h.b16 %v229
    %v775 = vunpack.c.l.b16 %v230
    %v776 = vunpack.c.h.b16 %v230
    %v777 = vunpack.c.l.b16 %v231
    %v778 = vunpack.c.h.b16 %v231
    %v779 = vunpack.c.l.b16 %v232
    %v780 = vunpack.c.h.b16 %v232
    %v781 = vunpack.c.l.b16 %v233
    %v782 = vunpack.c.h.b16 %v233
    %v783 = vunpack.c.l.b16 %v234
    %v784 = vunpack.c.h.b16 %v234
    %v785 = vunpack.c.l.b16 %v235
    %v786 = vunpack.c.h.b16 %v235
    %v787 = vunpack.c.l.b16 %v236
    %v788 = vunpack.c.h.b16 %v236
    %v789 = vunpack.c.l.b16 %v237
    %v790 = vunpack.c.h.b16 %v237
    %v791 = vunpack.c.l.b16 %v238
    %v792 = vunpack.c.h.b16 %v238
    %v793 = vunpack.c.l.b16 %v239
    %v794 = vunpack.c.h.b16 %v239
    %v795 = vunpack.c.l.b16 %v240
    %v796 = vunpack.c.h.b16 %v240
    %v797 = vunpack.c.l.b16 %v241
    %v798 = vunpack.c.h.b16 %v241
    %v799 = vunpack.c.l.b16 %v242
    %v800 = vunpack.c.h.b16 %v242
    %v801 = vunpack.c.l.b16 %v243
    %v802 = vunpack.c.h.b16 %v243
    %v803 = vunpack.c.l.b16 %v244
    %v804 = vunpack.c.h.b16 %v244
    %v805 = vunpack.c.l.b16 %v245
    %v806 = vunpack.c.h.b16 %v245
    %v807 = vunpack.c.l.b16 %v246
    %v808 = vunpack.c.h.b16 %v246
    %v809 = vunpack.c.l.b16 %v247
    %v810 = vunpack.c.h.b16 %v247
    %v811 = vunpack.c.l.b16 %v248
    %v812 = vunpack.c.h.b16 %v248
    %v813 = vunpack.c.l.b16 %v249
    %v814 = vunpack.c.h.b16 %v249
    %v815 = vunpack.c.l.b16 %v250
    %v816 = vunpack.c.h.b16 %v250
    %v817 = vunpack.c.l.b16 %v251
    %v818 = vunpack.c.h.b16 %v251
    %v819 = vunpack.c.l.b16 %v252
    %v820 = vunpack.c.h.b16 %v252
    %v821 = vunpack.c.l.b16 %v253
    %v822 = vunpack.c.h.b16 %v253
    %v823 = vunpack.c.l.b16 %v254
    %v824 = vunpack.c.h.b16 %v254
    %v825 = vunpack.c.l.b16 %v255
    %v826 = vunpack.c.h.b16 %v255
    %v827 = vunpack.c.l.b16 %v256
    %v828 = vunpack.c.h.b16 %v256
    %v829 = vunpack.c.l.b16 %v257
    %v830 = vunpack.c.h.b16 %v257
    %v831 = vunpack.c.l.b16 %v258
    %v832 = vunpack.c.h.b16 %v258
    %v833 = vunpack.c.l.b16 %v259
    %v834 = vunpack.c.h.b16 %v259
    %v835 = vunpack.c.l.b16 %v260
    %v836 = vunpack.c.h.b16 %v260
    %v837 = vunpack.c.l.b16 %v261
    %v838 = vunpack.c.h.b16 %v261
    %v839 = vunpack.c.l.b16 %v262
    %v840 = vunpack.c.h.b16 %v262
    %v841 = vunpack.c.l.b16 %v263
    %v842 = vunpack.c.h.b16 %v263
    %v843 = vunpack.c.l.b16 %v264
    %v844 = vunpack.c.h.b16 %v264
    %v845 = vunpack.c.l.b16 %v265
    %v846 = vunpack.c.h.b16 %v265
    %v847 = vunpack.c.l.b16 %v266
    %v848 = vunpack.c.h.b16 %v266
    %v849 = vpack.c.b16 %v467, %v465
    %v850 = vpack.c.b16 %v468, %v466
    %v851 = vpack.c.b16 %v471, %v469
    %v852 = vpack.c.b16 %v472, %v470
    %v853 = vpack.c.b16 %v475, %v473
    %v854 = vpack.c.b16 %v476, %v474
    %v855 = vpack.c.b16 %v479, %v477
    %v856 = vpack.c.b16 %v480, %v478
    %v857 = vpack.c.b16 %v483, %v481
    %v858 = vpack.c.b16 %v484, %v482
    %v859 = vpack.c.b16 %v487, %v485
    %v860 = vpack.c.b16 %v488, %v486
    %v861 = vpack.c.b16 %v491, %v489
    %v862 = vpack.c.b16 %v492, %v490
    %v863 = vpack.c.b16 %v495, %v493
    %v864 = vpack.c.b16 %v496, %v494
    %v865 = vpack.c.b16 %v499, %v497
    %v866 = vpack.c.b16 %v500, %v498
    %v867 = vpack.c.b16 %v503, %v501
    %v868 = vpack.c.b16 %v504, %v502
    %v869 = vpack.c.b16 %v507, %v505
    %v870 = vpack.c.b16 %v508, %v506
    %v871 = vpack.c.b16 %v511, %v509
    %v872 = vpack.c.b16 %v512, %v510
    %v873 = vpack.c.b16 %v515, %v513
    %v874 = vpack.c.b16 %v516, %v514
    %v875 = vpack.c.b16 %v519, %v517
    %v876 = vpack.c.b16 %v520, %v518
    %v877 = vpack.c.b16 %v523, %v521
    %v878 = vpack.c.b16 %v524, %v522
    %v879 = vpack.c.b16 %v527, %v525
    %v880 = vpack.c.b16 %v528, %v526
    %v881 = vpack.c.b16 %v531, %v529
    %v882 = vpack.c.b16 %v532, %v530
    %v883 = vpack.c.b16 %v535, %v533
    %v884 = vpack.c.b16 %v536, %v534
    %v885 = vpack.c.b16 %v539, %v537
    %v886 = vpack.c.b16 %v540, %v538
    %v887 = vpack.c.b16 %v543, %v541
    %v888 = vpack.c.b16 %v544, %v542
    %v889 = vpack.c.b16 %v547, %v545
    %v890 = vpack.c.b16 %v548, %v546
    %v891 = vpack.c.b16 %v551, %v549
    %v892 = vpack.c.b16 %v552, %v550
    %v893 = vpack.c.b16 %v555, %v553
    %v894 = vpack.c.b16 %v556, %v554
    %v895 = vpack.c.b16 %v559, %v557
    %v896 = vpack.c.b16 %v560, %v558
    %v897 = vpack.c.b16 %v563, %v561
    %v898 = vpack.c.b16 %v564, %v562
    %v899 = vpack.c.b16 %v567, %v565
    %v900 = vpack.c.b16 %v568, %v566
    %v901 = vpack.c.b16 %v571, %v569
    %v902 = vpack.c.b16 %v572, %v570
    %v903 = vpack.c.b16 %v575, %v573
    %v904 = vpack.c.b16 %v576, %v574
    %v905 = vpack.c.b16 %v579, %v577
    %v906 = vpack.c.b16 %v580, %v578
    %v907 = vpack.c.b16 %v583, %v581
    %v908 = vpack.c.b16 %v584, %v582
    %v909 = vpack.c.b16 %v587, %v585
    %v910 = vpack.c.b16 %v588, %v586
    %v911 = vpack.c.b16 %v591, %v589
    %v912 = vpack.c.b16 %v592, %v590
    %v913 = vpack.c.b16 %v595, %v593
    %v914 = vpack.c.b16 %v596, %v594
    %v915 = vpack.c.b16 %v599, %v597
    %v916 = vpack.c.b16 %v600, %v598
    %v917 = vpack.c.b16 %v603, %v601
    %v918 = vpack.c.b16 %v604, %v602
    %v919 = vpack.c.b16 %v607, %v605
    %v920 = vpack.c.b16 %v608, %v606
    %v921 = vpack.c.b16 %v611, %v609
    %v922 = vpack.c.b16 %v612, %v610
    %v923 = vpack.c.b16 %v615, %v613
    %v924 = vpack.c.b16 %v616, %v614
    %v925 = vpack.c.b16 %v619, %v617
    %v926 = vpack.c.b16 %v620, %v618
    %v927 = vpack.c.b16 %v623, %v621
    %v928 = vpack.c.b16 %v624, %v622
    %v929 = vpack.c.b16 %v627, %v625
    %v930 = vpack.c.b16 %v628, %v626
    %v931 = vpack.c.b16 %v631, %v629
    %v932 = vpack.c.b16 %v632, %v630
    %v933 = vpack.c.b16 %v635, %v633
    %v934 = vpack.c.b16 %v636, %v634
    %v935 = vpack.c.b16 %v639, %v637
    %v936 = vpack.c.b16 %v640, %v638
    %v937 = vpack.c.b16 %v643, %v641
    %v938 = vpack.c.b16 %v644, %v642
    %v939 = vpack.c.b16 %v647, %v645
    %v940 = vpack.c.b16 %v648, %v646
    %v941 = vpack.c.b16 %v651, %v649
    %v942 = vpack.c.b16 %v652, %v650
    %v943 = vpack.c.b16 %v655, %v653
    %v944 = vpack.c.b16 %v656, %v654
    %v945 = vpack.c.b16 %v659, %v657
    %v946 = vpack.c.b16 %v660, %v658
    %v947 = vpack.c.b16 %v663, %v661
    %v948 = vpack.c.b16 %v664, %v662
    %v949 = vpack.c.b16 %v667, %v665
    %v950 = vpack.c.b16 %v668, %v666
    %v951 = vpack.c.b16 %v671, %v669
    %v952 = vpack.c.b16 %v672, %v670
    %v953 = vpack.c.b16 %v675, %v673
    %v954 = vpack.c.b16 %v676, %v674
    %v955 = vpack.c.b16 %v679, %v677
    %v956 = vpack.c.b16 %v680, %v678
    %v957 = vpack.c.b16 %v683, %v681
    %v958 = vpack.c.b16 %v684, %v682
    %v959 = vpack.c.b16 %v687, %v685
    %v960 = vpack.c.b16 %v688, %v686
    %v961 = vpack.c.b16 %v691, %v689
    %v962 = vpack.c.b16 %v692, %v690
    %v963 = vpack.c.b16 %v695, %v693
    %v964 = vpack.c.b16 %v696, %v694
    %v965 = vpack.c.b16 %v699, %v697
    %v966 = vpack.c.b16 %v700, %v698
    %v967 = vpack.c.b16 %v703, %v701
    %v968 = vpack.c.b16 %v704, %v702
    %v969 = vpack.c.b16 %v707, %v705
    %v970 = vpack.c.b16 %v708, %v706
    %v971 = vpack.c.b16 %v711, %v709
    %v972 = vpack.c.b16 %v712, %v710
    %v973 = vpack.c.b16 %v715, %v713
    %v974 = vpack.c.b16 %v716, %v714
    %v975 = vpack.c.b16 %v719, %v717
    %v976 = vpack.c.b16 %v720, %v718
    %v977 = vpack.c.b16 %v723, %v721
    %v978 = vpack.c.b16 %v724, %v722
    %v979 = vpack.c.b16 %v727, %v725
    %v980 = vpack.c.b16 %v728, %v726
    %v981 = vpack.c.b16 %v731, %v729
    %v982 = vpack.c.b16 %v732, %v730
    %v983 = vpack.c.b16 %v735, %v733
    %v984 = vpack.c.b16 %v736, %v734
    %v985 = vpack.c.b16 %v739, %v737
    %v986 = vpack.c.b16 %v740, %v738
    %v987 = vpack.c.b16 %v743, %v741
    %v988 = vpack.c.b16 %v744, %v742
    %v989 = vpack.c.b16 %v747, %v745
    %v990 = vpack.c.b16 %v748, %v746
    %v991 = vpack.c.b16 %v751, %v749
    %v992 = vpack.c.b16 %v752, %v750
    %v993 = vpack.c.b16 %v755, %v753
    %v994 = vpack.c.b16 %v756, %v754
    %v995 = vpack.c.b16 %v759, %v757
    %v996 = vpack.c.b16 %v760, %v758
    %v997 = vpack.c.b16 %v763, %v761
    %v998 = vpack.c.b16 %v764, %v762
    %v999 = vpack.c.b16 %v767, %v765
    %v1000 = vpack.c.b16 %v768, %v766
    %v1001 = vpack.c.b16 %v771, %v769
    %v1002 = vpack.c.b16 %v772, %v770
    %v1003 = vpack.c.b16 %v775, %v773
    %v1004 = vpack.c.b16 %v776, %v774
    %v1005 = vpack.c.b16 %v779, %v777
    %v1006 = vpack.c.b16 %v780, %v778
    %v1007 = vpack.c.b16 %v783, %v781
    %v1008 = vpack.c.b16 %v784, %v782
    %v1009 = vpack.c.b16 %v787, %v785
    %v1010 = vpack.c.b16 %v788, %v786
    %v1011 = vpack.c.b16 %v791, %v789
    %v1012 = vpack.c.b16 %v792, %v790
    %v1013 = vpack.c.b16 %v795, %v793
    %v1014 = vpack.c.b16 %v796, %v794
    %v1015 = vpack.c.b16 %v799, %v797
    %v1016 = vpack.c.b16 %v800, %v798
    %v1017 = vpack.c.b16 %v803, %v801
    %v1018 = vpack.c.b16 %v804, %v802
    %v1019 = vpack.c.b16 %v807, %v805
    %v1020 = vpack.c.b16 %v808, %v806
    %v1021 = vpack.c.b16 %v811, %v809
    %v1022 = vpack.c.b16 %v812, %v810
    %v1023 = vpack.c.b16 %v815, %v813
    %v1024 = vpack.c.b16 %v816, %v814
    %v1025 = vpack.c.b16 %v819, %v817
    %v1026 = vpack.c.b16 %v820, %v818
    %v1027 = vpack.c.b16 %v823, %v821
    %v1028 = vpack.c.b16 %v824, %v822
    %v1029 = vpack.c.b16 %v827, %v825
    %v1030 = vpack.c.b16 %v828, %v826
    %v1031 = vpack.c.b16 %v831, %v829
    %v1032 = vpack.c.b16 %v832, %v830
    %v1033 = vpack.c.b16 %v835, %v833
    %v1034 = vpack.c.b16 %v836, %v834
    %v1035 = vpack.c.b16 %v839, %v837
    %v1036 = vpack.c.b16 %v840, %v838
    %v1037 = vpack.c.b16 %v843, %v841
    %v1038 = vpack.c.b16 %v844, %v842
    %v1039 = vpack.c.b16 %v847, %v845
    %v1040 = vpack.c.b16 %v848, %v846
    %1233 = vmatpush.bf16.msra.mxu0 %v863
    %1234 = vmatpush.bf16.msra.mxu0 %v861
    %1235 = vmatpush.bf16.msra.mxu0 %v859
    %1236 = vmatpush.bf16.msra.mxu0 %v857
    %1237 = vmatpush.bf16.msra.mxu0 %v855
    %1238 = vmatpush.bf16.msra.mxu0 %v853
    %1239 = vmatpush.bf16.msra.mxu0 %v851
    %1240 = vmatpush.bf16.msra.mxu0 %v849
    %1241 = vmatmul.bf16.gmra.mxu0 %v63
    %v1242 = vpop.f32.mrf.mxu0
    %v1243 = vadd.f32 %v269, %v1242
    %v1244 = vpop.f32.mrf.mxu0
    %1245 = vdwg.mxu0
    %1246 = vmatpush.bf16.msra.mxu0 %v879
    %1247 = vmatpush.bf16.msra.mxu0 %v877
    %1248 = vmatpush.bf16.msra.mxu0 %v875
    %1249 = vmatpush.bf16.msra.mxu0 %v873
    %1250 = vmatpush.bf16.msra.mxu0 %v871
    %1251 = vmatpush.bf16.msra.mxu0 %v869
    %1252 = vmatpush.bf16.msra.mxu0 %v867
    %1253 = vmatpush.bf16.msra.mxu0 %v865
    %1254 = vmatmul.bf16.gmra.mxu0 %v64
    %v1255 = vpop.f32.mrf.mxu0
    %v1256 = vadd.f32 %v1243, %v1255
    %v1257 = vpop.f32.mrf.mxu0
    %1258 = vdwg.mxu0
    %1259 = vmatpush.bf16.msra.mxu0 %v895
    %1260 = vmatpush.bf16.msra.mxu0 %v893
    %1261 = vmatpush.bf16.msra.mxu0 %v891
    %1262 = vmatpush.bf16.msra.mxu0 %v889
    %1263 = vmatpush.bf16.msra.mxu0 %v887
    %1264 = vmatpush.bf16.msra.mxu0 %v885
    %1265 = vmatpush.bf16.msra.mxu0 %v883
    %1266 = vmatpush.bf16.msra.mxu0 %v881
    %1267 = vmatmul.bf16.gmra.mxu0 %v65
    %v1268 = vpop.f32.mrf.mxu0
    %v1269 = vadd.f32 %v1256, %v1268
    %v1270 = vpop.f32.mrf.mxu0
    %1271 = vdwg.mxu0
    %1272 = vmatpush.bf16.msra.mxu0 %v911
    %1273 = vmatpush.bf16.msra.mxu0 %v909
    %1274 = vmatpush.bf16.msra.mxu0 %v907
    %1275 = vmatpush.bf16.msra.mxu0 %v905
    %1276 = vmatpush.bf16.msra.mxu0 %v903
    %1277 = vmatpush.bf16.msra.mxu0 %v901
    %1278 = vmatpush.bf16.msra.mxu0 %v899
    %1279 = vmatpush.bf16.msra.mxu0 %v897
    %1280 = vmatmul.bf16.gmra.mxu0 %v66
    %v1281 = vpop.f32.mrf.mxu0
    %v1282 = vadd.f32 %v1269, %v1281
    %v1283 = vpop.f32.mrf.mxu0
    %1284 = vdwg.mxu0
    %1285 = vmatpush.bf16.msra.mxu0 %v927
    %1286 = vmatpush.bf16.msra.mxu0 %v925
    %1287 = vmatpush.bf16.msra.mxu0 %v923
    %1288 = vmatpush.bf16.msra.mxu0 %v921
    %1289 = vmatpush.bf16.msra.mxu0 %v919
    %1290 = vmatpush.bf16.msra.mxu0 %v917
    %1291 = vmatpush.bf16.msra.mxu0 %v915
    %1292 = vmatpush.bf16.msra.mxu0 %v913
    %1293 = vmatmul.bf16.gmra.mxu0 %v67
    %v1294 = vpop.f32.mrf.mxu0
    %v1295 = vadd.f32 %v1282, %v1294
    %v1296 = vpop.f32.mrf.mxu0
    %1297 = vdwg.mxu0
    %1298 = vmatpush.bf16.msra.mxu0 %v943
    %1299 = vmatpush.bf16.msra.mxu0 %v941
    %1300 = vmatpush.bf16.msra.mxu0 %v939
    %1301 = vmatpush.bf16.msra.mxu0 %v937
    %1302 = vmatpush.bf16.msra.mxu0 %v935
    %1303 = vmatpush.bf16.msra.mxu0 %v933
    %1304 = vmatpush.bf16.msra.mxu0 %v931
    %1305 = vmatpush.bf16.msra.mxu0 %v929
    %1306 = vmatmul.bf16.gmra.mxu0 %v68
    %v1307 = vpop.f32.mrf.mxu0
    %v1308 = vadd.f32 %v1295, %v1307
    %v1309 = vpop.f32.mrf.mxu0
    %1310 = vdwg.mxu0
    %1311 = vmatpush.bf16.msra.mxu0 %v959
    %1312 = vmatpush.bf16.msra.mxu0 %v957
    %1313 = vmatpush.bf16.msra.mxu0 %v955
    %1314 = vmatpush.bf16.msra.mxu0 %v953
    %1315 = vmatpush.bf16.msra.mxu0 %v951
    %1316 = vmatpush.bf16.msra.mxu0 %v949
    %1317 = vmatpush.bf16.msra.mxu0 %v947
    %1318 = vmatpush.bf16.msra.mxu0 %v945
    %1319 = vmatmul.bf16.gmra.mxu0 %v69
    %v1320 = vpop.f32.mrf.mxu0
    %v1321 = vadd.f32 %v1308, %v1320
    %v1322 = vpop.f32.mrf.mxu0
    %1323 = vdwg.mxu0
    %1324 = vmatpush.bf16.msra.mxu0 %v975
    %1325 = vmatpush.bf16.msra.mxu0 %v973
    %1326 = vmatpush.bf16.msra.mxu0 %v971
    %1327 = vmatpush.bf16.msra.mxu0 %v969
    %1328 = vmatpush.bf16.msra.mxu0 %v967
    %1329 = vmatpush.bf16.msra.mxu0 %v965
    %1330 = vmatpush.bf16.msra.mxu0 %v963
    %1331 = vmatpush.bf16.msra.mxu0 %v961
    %1332 = vmatmul.bf16.gmra.mxu0 %v70
    %v1333 = vpop.f32.mrf.mxu0
    %v1334 = vadd.f32 %v1321, %v1333
    %v1335 = vpop.f32.mrf.mxu0
    %1336 = vdwg.mxu0
    %1337 = vmatpush.bf16.msra.mxu0 %v991
    %1338 = vmatpush.bf16.msra.mxu0 %v989
    %1339 = vmatpush.bf16.msra.mxu0 %v987
    %1340 = vmatpush.bf16.msra.mxu0 %v985
    %1341 = vmatpush.bf16.msra.mxu0 %v983
    %1342 = vmatpush.bf16.msra.mxu0 %v981
    %1343 = vmatpush.bf16.msra.mxu0 %v979
    %1344 = vmatpush.bf16.msra.mxu0 %v977
    %1345 = vmatmul.bf16.gmra.mxu0 %v71
    %v1346 = vpop.f32.mrf.mxu0
    %v1347 = vadd.f32 %v1334, %v1346
    %v1348 = vpop.f32.mrf.mxu0
    %1349 = vdwg.mxu0
    %1350 = vmatpush.bf16.msra.mxu0 %v1007
    %1351 = vmatpush.bf16.msra.mxu0 %v1005
    %1352 = vmatpush.bf16.msra.mxu0 %v1003
    %1353 = vmatpush.bf16.msra.mxu0 %v1001
    %1354 = vmatpush.bf16.msra.mxu0 %v999
    %1355 = vmatpush.bf16.msra.mxu0 %v997
    %1356 = vmatpush.bf16.msra.mxu0 %v995
    %1357 = vmatpush.bf16.msra.mxu0 %v993
    %1358 = vmatmul.bf16.gmra.mxu0 %v72
    %v1359 = vpop.f32.mrf.mxu0
    %v1360 = vadd.f32 %v1347, %v1359
    %v1361 = vpop.f32.mrf.mxu0
    %1362 = vdwg.mxu0
    %1363 = vmatpush.bf16.msra.mxu0 %v1023
    %1364 = vmatpush.bf16.msra.mxu0 %v1021
    %1365 = vmatpush.bf16.msra.mxu0 %v1019
    %1366 = vmatpush.bf16.msra.mxu0 %v1017
    %1367 = vmatpush.bf16.msra.mxu0 %v1015
    %1368 = vmatpush.bf16.msra.mxu0 %v1013
    %1369 = vmatpush.bf16.msra.mxu0 %v1011
    %1370 = vmatpush.bf16.msra.mxu0 %v1009
    %1371 = vmatmul.bf16.gmra.mxu0 %v73
    %v1372 = vpop.f32.mrf.mxu0
    %v1373 = vadd.f32 %v1360, %v1372
    %v1374 = vpop.f32.mrf.mxu0
    %1375 = vdwg.mxu0
    %1376 = vmatpush.bf16.msra.mxu0 %v1039
    %1377 = vmatpush.bf16.msra.mxu0 %v1037
    %1378 = vmatpush.bf16.msra.mxu0 %v1035
    %1379 = vmatpush.bf16.msra.mxu0 %v1033
    %1380 = vmatpush.bf16.msra.mxu0 %v1031
    %1381 = vmatpush.bf16.msra.mxu0 %v1029
    %1382 = vmatpush.bf16.msra.mxu0 %v1027
    %1383 = vmatpush.bf16.msra.mxu0 %v1025
    %1384 = vmatmul.bf16.gmra.mxu0 %v74
    %v1385 = vpop.f32.mrf.mxu0
    %v1386 = vadd.f32 %v1373, %v1385
    %v1387 = vpop.f32.mrf.mxu0
    %1388 = vdwg.mxu0
    %1389 = vmatpush.bf16.msra.mxu0 %v864
    %1390 = vmatpush.bf16.msra.mxu0 %v862
    %1391 = vmatpush.bf16.msra.mxu0 %v860
    %1392 = vmatpush.bf16.msra.mxu0 %v858
    %1393 = vmatpush.bf16.msra.mxu0 %v856
    %1394 = vmatpush.bf16.msra.mxu0 %v854
    %1395 = vmatpush.bf16.msra.mxu0 %v852
    %1396 = vmatpush.bf16.msra.mxu0 %v850
    %1397 = vmatmul.bf16.gmra.mxu0 %v63
    %v1398 = vpop.f32.mrf.mxu0
    %v1399 = vadd.f32 %v270, %v1398
    %v1400 = vpop.f32.mrf.mxu0
    %1401 = vdwg.mxu0
    %1402 = vmatpush.bf16.msra.mxu0 %v880
    %1403 = vmatpush.bf16.msra.mxu0 %v878
    %1404 = vmatpush.bf16.msra.mxu0 %v876
    %1405 = vmatpush.bf16.msra.mxu0 %v874
    %1406 = vmatpush.bf16.msra.mxu0 %v872
    %1407 = vmatpush.bf16.msra.mxu0 %v870
    %1408 = vmatpush.bf16.msra.mxu0 %v868
    %1409 = vmatpush.bf16.msra.mxu0 %v866
    %1410 = vmatmul.bf16.gmra.mxu0 %v64
    %v1411 = vpop.f32.mrf.mxu0
    %v1412 = vadd.f32 %v1399, %v1411
    %v1413 = vpop.f32.mrf.mxu0
    %1414 = vdwg.mxu0
    %1415 = vmatpush.bf16.msra.mxu0 %v896
    %1416 = vmatpush.bf16.msra.mxu0 %v894
    %1417 = vmatpush.bf16.msra.mxu0 %v892
    %1418 = vmatpush.bf16.msra.mxu0 %v890
    %1419 = vmatpush.bf16.msra.mxu0 %v888
    %1420 = vmatpush.bf16.msra.mxu0 %v886
    %1421 = vmatpush.bf16.msra.mxu0 %v884
    %1422 = vmatpush.bf16.msra.mxu0 %v882
    %1423 = vmatmul.bf16.gmra.mxu0 %v65
    %v1424 = vpop.f32.mrf.mxu0
    %v1425 = vadd.f32 %v1412, %v1424
    %v1426 = vpop.f32.mrf.mxu0
    %1427 = vdwg.mxu0
    %1428 = vmatpush.bf16.msra.mxu0 %v912
    %1429 = vmatpush.bf16.msra.mxu0 %v910
    %1430 = vmatpush.bf16.msra.mxu0 %v908
    %1431 = vmatpush.bf16.msra.mxu0 %v906
    %1432 = vmatpush.bf16.msra.mxu0 %v904
    %1433 = vmatpush.bf16.msra.mxu0 %v902
    %1434 = vmatpush.bf16.msra.mxu0 %v900
    %1435 = vmatpush.bf16.msra.mxu0 %v898
    %1436 = vmatmul.bf16.gmra.mxu0 %v66
    %v1437 = vpop.f32.mrf.mxu0
    %v1438 = vadd.f32 %v1425, %v1437
    %v1439 = vpop.f32.mrf.mxu0
    %1440 = vdwg.mxu0
    %1441 = vmatpush.bf16.msra.mxu0 %v928
    %1442 = vmatpush.bf16.msra.mxu0 %v926
    %1443 = vmatpush.bf16.msra.mxu0 %v924
    %1444 = vmatpush.bf16.msra.mxu0 %v922
    %1445 = vmatpush.bf16.msra.mxu0 %v920
    %1446 = vmatpush.bf16.msra.mxu0 %v918
    %1447 = vmatpush.bf16.msra.mxu0 %v916
    %1448 = vmatpush.bf16.msra.mxu0 %v914
    %1449 = vmatmul.bf16.gmra.mxu0 %v67
    %v1450 = vpop.f32.mrf.mxu0
    %v1451 = vadd.f32 %v1438, %v1450
    %v1452 = vpop.f32.mrf.mxu0
    %1453 = vdwg.mxu0
    %1454 = vmatpush.bf16.msra.mxu0 %v944
    %1455 = vmatpush.bf16.msra.mxu0 %v942
    %1456 = vmatpush.bf16.msra.mxu0 %v940
    %1457 = vmatpush.bf16.msra.mxu0 %v938
    %1458 = vmatpush.bf16.msra.mxu0 %v936
    %1459 = vmatpush.bf16.msra.mxu0 %v934
    %1460 = vmatpush.bf16.msra.mxu0 %v932
    %1461 = vmatpush.bf16.msra.mxu0 %v930
    %1462 = vmatmul.bf16.gmra.mxu0 %v68
    %v1463 = vpop.f32.mrf.mxu0
    %v1464 = vadd.f32 %v1451, %v1463
    %v1465 = vpop.f32.mrf.mxu0
    %1466 = vdwg.mxu0
    %1467 = vmatpush.bf16.msra.mxu0 %v960
    %1468 = vmatpush.bf16.msra.mxu0 %v958
    %1469 = vmatpush.bf16.msra.mxu0 %v956
    %1470 = vmatpush.bf16.msra.mxu0 %v954
    %1471 = vmatpush.bf16.msra.mxu0 %v952
    %1472 = vmatpush.bf16.msra.mxu0 %v950
    %1473 = vmatpush.bf16.msra.mxu0 %v948
    %1474 = vmatpush.bf16.msra.mxu0 %v946
    %1475 = vmatmul.bf16.gmra.mxu0 %v69
    %v1476 = vpop.f32.mrf.mxu0
    %v1477 = vadd.f32 %v1464, %v1476
    %v1478 = vpop.f32.mrf.mxu0
    %1479 = vdwg.mxu0
    %1480 = vmatpush.bf16.msra.mxu0 %v976
    %1481 = vmatpush.bf16.msra.mxu0 %v974
    %1482 = vmatpush.bf16.msra.mxu0 %v972
    %1483 = vmatpush.bf16.msra.mxu0 %v970
    %1484 = vmatpush.bf16.msra.mxu0 %v968
    %1485 = vmatpush.bf16.msra.mxu0 %v966
    %1486 = vmatpush.bf16.msra.mxu0 %v964
    %1487 = vmatpush.bf16.msra.mxu0 %v962
    %1488 = vmatmul.bf16.gmra.mxu0 %v70
    %v1489 = vpop.f32.mrf.mxu0
    %v1490 = vadd.f32 %v1477, %v1489
    %v1491 = vpop.f32.mrf.mxu0
    %1492 = vdwg.mxu0
    %1493 = vmatpush.bf16.msra.mxu0 %v992
    %1494 = vmatpush.bf16.msra.mxu0 %v990
    %1495 = vmatpush.bf16.msra.mxu0 %v988
    %1496 = vmatpush.bf16.msra.mxu0 %v986
    %1497 = vmatpush.bf16.msra.mxu0 %v984
    %1498 = vmatpush.bf16.msra.mxu0 %v982
    %1499 = vmatpush.bf16.msra.mxu0 %v980
    %1500 = vmatpush.bf16.msra.mxu0 %v978
    %1501 = vmatmul.bf16.gmra.mxu0 %v71
    %v1502 = vpop.f32.mrf.mxu0
    %v1503 = vadd.f32 %v1490, %v1502
    %v1504 = vpop.f32.mrf.mxu0
    %1505 = vdwg.mxu0
    %1506 = vmatpush.bf16.msra.mxu0 %v1008
    %1507 = vmatpush.bf16.msra.mxu0 %v1006
    %1508 = vmatpush.bf16.msra.mxu0 %v1004
    %1509 = vmatpush.bf16.msra.mxu0 %v1002
    %1510 = vmatpush.bf16.msra.mxu0 %v1000
    %1511 = vmatpush.bf16.msra.mxu0 %v998
    %1512 = vmatpush.bf16.msra.mxu0 %v996
    %1513 = vmatpush.bf16.msra.mxu0 %v994
    %1514 = vmatmul.bf16.gmra.mxu0 %v72
    %v1515 = vpop.f32.mrf.mxu0
    %v1516 = vadd.f32 %v1503, %v1515
    %v1517 = vpop.f32.mrf.mxu0
    %1518 = vdwg.mxu0
    %1519 = vmatpush.bf16.msra.mxu0 %v1024
    %1520 = vmatpush.bf16.msra.mxu0 %v1022
    %1521 = vmatpush.bf16.msra.mxu0 %v1020
    %1522 = vmatpush.bf16.msra.mxu0 %v1018
    %1523 = vmatpush.bf16.msra.mxu0 %v1016
    %1524 = vmatpush.bf16.msra.mxu0 %v1014
    %1525 = vmatpush.bf16.msra.mxu0 %v1012
    %1526 = vmatpush.bf16.msra.mxu0 %v1010
    %1527 = vmatmul.bf16.gmra.mxu0 %v73
    %v1528 = vpop.f32.mrf.mxu0
    %v1529 = vadd.f32 %v1516, %v1528
    %v1530 = vpop.f32.mrf.mxu0
    %1531 = vdwg.mxu0
    %1532 = vmatpush.bf16.msra.mxu0 %v1040
    %1533 = vmatpush.bf16.msra.mxu0 %v1038
    %1534 = vmatpush.bf16.msra.mxu0 %v1036
    %1535 = vmatpush.bf16.msra.mxu0 %v1034
    %1536 = vmatpush.bf16.msra.mxu0 %v1032
    %1537 = vmatpush.bf16.msra.mxu0 %v1030
    %1538 = vmatpush.bf16.msra.mxu0 %v1028
    %1539 = vmatpush.bf16.msra.mxu0 %v1026
    %1540 = vmatmul.bf16.gmra.mxu0 %v74
    %v1541 = vpop.f32.mrf.mxu0
    %v1542 = vadd.f32 %v1529, %v1541
    %v1543 = vpop.f32.mrf.mxu0
    %1544 = vdwg.mxu0
    %v1545 = vmax.f32 %v1386, 0.0
    %v1546 = vmax.f32 %v1542, 0.0
    %v1547 = vld [vmem:[%s3] sm:$0x3]
    %v1549 = vperm.slane %v1547, 0
    %v1550 = vperm.slane %v1547, 1
    %v1553 = vmul.f32 %v1545, %v1549
    %v1554 = vmul.f32 %v1546, %v1550
    %v1555 = vadd.f32 %v1553, %v1554
    %1556 = vadd.xlane.f32.xlu0 %v1555
    %v1557 = vpop.xlane.xlu0 %1556
    %s1558 = sld [smem:[#allocation2]]
    %v1559 = vstv %s1558
    %v1560 = vadd.f32 %v1557, %v1559
    %vm1561 = vcmask 7168
    %1562 = vst.msk [vmem:[%s5] sm:$0xff] %vm1561, %v1560
    // Predicated region
    $region30: #{tpu_custom_call.1} parent=1 // pred_check
      _
    $region31: #{tpu_custom_call.1} parent=1 // pred_check_branch
      %1564 = sbr.rel (0) target = $region33
    $region32: #{tpu_custom_call.1} parent=1 // pred_region
      _
    $region33: #{tpu_custom_call.1} parent=1 // pred_fallthru
      _
    // Predicated region
    $region34: #{tpu_custom_call.1} parent=1 // pred_check
      _
    $region35: #{tpu_custom_call.1} parent=1 // pred_check_branch
      %1566 = sbr.rel (0) target = $region37
    $region36: #{tpu_custom_call.1} parent=1 // pred_region
      _
    $region37: #{tpu_custom_call.1} parent=1 // pred_fallthru
      _
    %1567 = vsyncpa [#allocation4], 1
    %1568 = vsyncpa [#allocation6], 1

</llo_original>
